<compile_context>
chip_gen: v5e
topology: v5e:2x2
jax: 0.10.0
libtpu: 0.0.40
codegen_flags: <defaults>
</compile_context>

<pallas_src>
import jax
import jax.numpy as jnp
from jax.experimental import pallas as pl
from jax.experimental.pallas import tpu as pltpu

C_IN = 16     # linear in_features
C_OUT = 32    # linear out_features
H = 4
W = 4
HW = H * W    # 16 spatial positions = output lane width


def _fused_linear_add_relu_kernel(w_ref, x_ref, off_ref, out_ref):
    """Fused relu(W @ x_bcast + offset).

    w_ref   : (C_OUT, C_IN) = (32, 16) f32   linear weight
    x_ref   : (C_IN, HW)    = (16, 16) f32   x broadcast across the HW lanes
    off_ref : (C_OUT, HW)   = (32, 16) f32   bias + noise (precomputed)
    out_ref : (C_OUT, HW)   = (32, 16) f32
    """
    # One small MXU pass: every column of x_ref is the same x vector, so every
    # output column equals v1 = W @ x  (exact — no padding tricks needed).
    v1 = jnp.dot(w_ref[...], x_ref[...], preferred_element_type=jnp.float32)
    out_ref[...] = jnp.maximum(v1 + off_ref[...], 0.0).astype(out_ref.dtype)


def prepare_constants(weight, bias, noise_nchw):
    """x-independent prep; run once, outside the per-call hot path."""
    w = weight.astype(jnp.float32)                                   # (32, 16)
    offset = (bias.reshape(C_OUT, 1).astype(jnp.float32)
              + noise_nchw.reshape(C_OUT, HW).astype(jnp.float32))   # (32, 16)
    return w, offset


@jax.jit
def model_forward(x1, weight_f32, offset):
    """x1: (1,16), weight_f32: (32,16), offset: (32,16) -> (1,32,4,4)."""
    # Only per-call prep: lane-broadcast x to (16, 16)  (~1 KiB).
    x_bcast = jnp.broadcast_to(
        x1.reshape(C_IN, 1).astype(jnp.float32), (C_IN, HW))

    out2d = pl.pallas_call(
        _fused_linear_add_relu_kernel,
        out_shape=jax.ShapeDtypeStruct((C_OUT, HW), jnp.float32),
        in_specs=[pl.BlockSpec(memory_space=pltpu.VMEM),
                  pl.BlockSpec(memory_space=pltpu.VMEM),
                  pl.BlockSpec(memory_space=pltpu.VMEM)],
        out_specs=pl.BlockSpec(memory_space=pltpu.VMEM),
    )(weight_f32, x_bcast, offset)

    # (32, 16) -> (1, 32, 4, 4): pure bitcast, no slicing.
    return out2d.reshape(1, C_OUT, H, W)


if __name__ == "__main__":
    key = jax.random.PRNGKey(0)
    k_x, k_w, k_b, k_n = jax.random.split(key, 4)

    # Deterministic "parameters" / inputs (shapes per the module).
    x1 = jax.random.normal(k_x, (1, C_IN), dtype=jnp.float32)
    # Linear(16, 32): weight (32, 16), bias (32,)  (uniform init like nn.Linear)
    bound = 1.0 / jnp.sqrt(float(C_IN))
    weight = jax.random.uniform(k_w, (C_OUT, C_IN), minval=-bound, maxval=bound,
                                dtype=jnp.float32)
    bias = jax.random.uniform(k_b, (C_OUT,), minval=-bound, maxval=bound,
                              dtype=jnp.float32)
    # The module's internal torch.randn(1, 32, 4, 4) — deterministic here.
    noise = jax.random.normal(k_n, (1, C_OUT, H, W), dtype=jnp.float32)

    # x-independent constants prepared once (hoisted out of the hot path).
    weight_f32, offset = prepare_constants(weight, bias, noise)
    weight_f32 = jax.block_until_ready(weight_f32)
    offset = jax.block_until_ready(offset)

    out = model_forward(x1, weight_f32, offset)
    out = jax.block_until_ready(out)

    # Pure-JAX reference check of the fused kernel.
    v1 = x1 @ weight.T + bias                       # (1, 32)
    ref = jnp.maximum(v1[:, :, None, None] + noise, 0.0)
    assert out.shape == (1, C_OUT, H, W)
    assert jnp.allclose(out, ref, atol=1e-5, rtol=1e-5)

    print("KERNEL_OK")
</pallas_src>

<mosaic_0001>
module attributes {stable_mosaic.version = 11 : i64} {
  func.func @_fused_linear_add_relu_kernel(%arg0: memref<32x16xf32, #tpu.memory_space<vmem>>, %arg1: memref<16x16xf32, #tpu.memory_space<vmem>>, %arg2: memref<32x16xf32, #tpu.memory_space<vmem>>, %arg3: memref<32x16xf32, #tpu.memory_space<vmem>>) attributes {dimension_semantics = [], scalar_prefetch = 0 : i64, scratch_operands = 0 : i64, tpu.core_type = #tpu.core_type<tc>} {
    %c0 = arith.constant 0 : index
    %c0_0 = arith.constant 0 : index
    %0 = vector.load %arg0[%c0, %c0_0] : memref<32x16xf32, #tpu.memory_space<vmem>>, vector<32x16xf32>
    %c0_1 = arith.constant 0 : index
    %c0_2 = arith.constant 0 : index
    %1 = vector.load %arg1[%c0_1, %c0_2] : memref<16x16xf32, #tpu.memory_space<vmem>>, vector<16x16xf32>
    %cst = arith.constant dense<0.000000e+00> : vector<32x16xf32>
    %2 = tpu.matmul %0, %1, %cst {dimension_numbers = #tpu.dot_dimension_numbers<[1], [0], [0], [1], [0, 0, 1, 1], [], []>} : vector<32x16xf32>, vector<16x16xf32>, vector<32x16xf32> -> vector<32x16xf32>
    %c0_3 = arith.constant 0 : index
    %c0_4 = arith.constant 0 : index
    %3 = vector.load %arg2[%c0_3, %c0_4] : memref<32x16xf32, #tpu.memory_space<vmem>>, vector<32x16xf32>
    %4 = arith.addf %2, %3 : vector<32x16xf32>
    %cst_5 = arith.constant 0.000000e+00 : f32
    %5 = vector.broadcast %cst_5 : f32 to vector<32x16xf32>
    %6 = arith.maximumf %4, %5 : vector<32x16xf32>
    %c0_6 = arith.constant 0 : index
    %c0_7 = arith.constant 0 : index
    %7 = vector.load %arg3[%c0_6, %c0_7] : memref<32x16xf32, #tpu.memory_space<vmem>>, vector<32x16xf32>
    tpu.vector_store %arg3[%c0_6, %c0_7], %6 {strides = array<i32>} : memref<32x16xf32, #tpu.memory_space<vmem>>, vector<32x16xf32>,
    return
  }
}

</mosaic_0001>

<llo_original>
// kernel: model_forward.1
$region0: #{model_forward.1}
  #allocation0 [shape = 'u32[]', space=smem, size = 0x4, offset = 0x4, fixed_abs, tag = 'smem constant byte address 0x4 - core index']
  #allocation1 [shape = 'u32[72,128]{1,0:T(1,128)}', space=vmem, size = 0x9000, scoped, tag = 'internal scratch']
  %s0 = inlined_call_operand.vmem [shape: f32[32,16], index: 0, kind: input, shape index: {}]
  %s1 = inlined_call_operand.vmem [shape: f32[16,16], index: 1, kind: input, shape index: {}]
  %s2 = inlined_call_operand.vmem [shape: f32[32,16], index: 2, kind: input, shape index: {}]
  %s3 = inlined_call_operand.vmem [shape: f32[32,16], index: 3, kind: output, shape index: {}]
  %s4 = sld [smem:[#allocation0]]
  $region22: #{model_forward.1} parent=0
    _
  %s6 = ssub.s32 1, %s4
  %s7 = scalar_select 0, %s6, %s4
  // Predicated region
  $region2: #{model_forward.1} parent=0 // pred_check
    _
  $region3: #{model_forward.1} parent=0 // pred_check_branch
    %9 = sbr.rel (0) target = $region5
  $region4: #{model_forward.1} parent=0 // pred_region
    _
  $region5: #{model_forward.1} parent=0 // pred_fallthru
    _
  // Predicated region
  $region6: #{model_forward.1} parent=0 // pred_check
    _
  $region7: #{model_forward.1} parent=0 // pred_check_branch
    %11 = sbr.rel (0) target = $region9
  $region8: #{model_forward.1} parent=0 // pred_region
    _
  $region9: #{model_forward.1} parent=0 // pred_fallthru
    _
  // Predicated region
  $region10: #{model_forward.1} parent=0 // pred_check
    _
  $region11: #{model_forward.1} parent=0 // pred_check_branch
    %13 = sbr.rel (0) target = $region13
  $region12: #{model_forward.1} parent=0 // pred_region
    _
  $region13: #{model_forward.1} parent=0 // pred_fallthru
    _
  %v14 = vld [vmem:[%s0] sm:$0xff]
  %v15 = vld [vmem:[%s0 + $0x8] sm:$0xff]
  %v16 = vld [vmem:[%s0 + $0x10] sm:$0xff]
  %v17 = vld [vmem:[%s0 + $0x18] sm:$0xff]
  %v18 = vld [vmem:[%s1] sm:$0xff]
  %v19 = vld [vmem:[%s1 + $0x8] sm:$0xff]
  %v20 = vld [vmem:[%s2] sm:$0xff]
  %v21 = vld [vmem:[%s2 + $0x8] sm:$0xff]
  %v22 = vld [vmem:[%s2 + $0x10] sm:$0xff]
  %v23 = vld [vmem:[%s2 + $0x18] sm:$0xff]
  %vm24 = vcmask 130048
  %v26 = vsel %vm24, %v14, 0
  %v29 = vsel %vm24, %v15, 0
  %v32 = vsel %vm24, %v16, 0
  %v35 = vsel %vm24, %v17, 0
  %37 = vmatpush.msra.mxu0 0.0
  %38 = vmatpush.msra.mxu0 0.0
  %39 = vmatpush.msra.mxu0 0.0
  %40 = vmatpush.msra.mxu0 0.0
  %41 = vmatpush.msra.mxu0 0.0
  %42 = vmatpush.msra.mxu0 0.0
  %43 = vmatpush.msra.mxu0 0.0
  %44 = vmatpush.msra.mxu0 0.0
  %45 = vmatpush.msra.mxu0 0.0
  %46 = vmatpush.msra.mxu0 0.0
  %47 = vmatpush.msra.mxu0 0.0
  %48 = vmatpush.msra.mxu0 0.0
  %49 = vmatpush.msra.mxu0 0.0
  %50 = vmatpush.msra.mxu0 0.0
  %51 = vmatpush.msra.mxu0 %v19
  %52 = vmatpush.msra.mxu0 %v18
  %53 = vmatmul.f32.gmra.mxu0 %v26
  %v54 = vpop.f32.mrf.mxu0
  %v55 = vadd.f32 %v20, %v54
  %56 = vmatmul.f32.gmra.mxu0 %v29
  %v57 = vpop.f32.mrf.mxu0
  %v58 = vadd.f32 %v21, %v57
  %59 = vmatmul.f32.gmra.mxu0 %v32
  %v60 = vpop.f32.mrf.mxu0
  %v61 = vadd.f32 %v22, %v60
  %62 = vmatmul.f32.gmra.mxu0 %v35
  %v63 = vpop.f32.mrf.mxu0
  %v64 = vadd.f32 %v23, %v63
  %65 = vdwg.mxu0
  %v66 = vmax.f32 %v55, 0.0
  %v67 = vmax.f32 %v58, 0.0
  %v68 = vmax.f32 %v61, 0.0
  %v69 = vmax.f32 %v64, 0.0
  %70 = vst.msk [vmem:[%s3] sm:$0xff] %vm24, %v66
  %71 = vst.msk [vmem:[%s3 + $0x8] sm:$0xff] %vm24, %v67
  %72 = vst.msk [vmem:[%s3 + $0x10] sm:$0xff] %vm24, %v68
  %73 = vst.msk [vmem:[%s3 + $0x18] sm:$0xff] %vm24, %v69
  // Predicated region
  $region14: #{model_forward.1} parent=0 // pred_check
    _
  $region15: #{model_forward.1} parent=0 // pred_check_branch
    %75 = sbr.rel (0) target = $region17
  $region16: #{model_forward.1} parent=0 // pred_region
    _
  $region17: #{model_forward.1} parent=0 // pred_fallthru
    _
  // Predicated region
  $region18: #{model_forward.1} parent=0 // pred_check
    _
  $region19: #{model_forward.1} parent=0 // pred_check_branch
    %77 = sbr.rel (0) target = $region21
  $region20: #{model_forward.1} parent=0 // pred_region
    _
  $region21: #{model_forward.1} parent=0 // pred_fallthru
    _

</llo_original>
